<compile_context>
chip_gen: v6e
topology: v6e:2x2x1
jax: 0.10.0
libtpu: 0.0.40
codegen_flags: <defaults>
</compile_context>

<pallas_src>
import jax
import jax.numpy as jnp
import numpy as np
from jax.experimental import pallas as pl
from jax.experimental.pallas import tpu as pltpu


def _make_kernel(exact):
    """Kernel expanding a (Bt, T, H) block of sequences into a (Bt, TL, H)
    tile of output frames starting at frame pl.program_id(1) * TL."""

    def kernel(cs_ref, xh_ref, *rest):
        if exact:
            xl_ref, o_ref = rest
        else:
            (o_ref,) = rest
        TL = o_ref.shape[1]

        cs_lo = cs_ref[:, 0:1, :]                      # (Bt, 1, T) int32
        cs_hi = cs_ref[:, 1:2, :]                      # (Bt, 1, T) int32

        # Global output-frame index of each row in this L-tile (minimal-shape
        # iota; the comparisons broadcast it against the (Bt, 1, T) bounds).
        j = pl.program_id(1) * TL + jax.lax.broadcasted_iota(
            jnp.int32, (1, TL, 1), dimension=1)

        # One-hot selection matrix: exactly one token per valid frame, all-zero
        # rows for frames beyond mel_len / truncated frames / padded tokens.
        sel = jnp.logical_and(j >= cs_lo, j < cs_hi).astype(jnp.bfloat16)

        dn = (((2,), (1,)), ((0,), (0,)))              # contract T, batch Bt
        out = jax.lax.dot_general(sel, xh_ref[...], dn,
                                  preferred_element_type=jnp.float32)
        if exact:
            # Second bf16 matmul with the low-order part reproduces f32 x to
            # ~2^-16 relative error (products with exact 0/1, f32 accumulate).
            out = out + jax.lax.dot_general(sel, xl_ref[...], dn,
                                            preferred_element_type=jnp.float32)
        o_ref[...] = out.astype(o_ref.dtype)

    return kernel


def _round_up(n, m):
    return -(-n // m) * m


def _pick_batch_tile(B, block_b):
    """Largest divisor of B <= block_b (no padded-row waste); fall back to
    batch padding only when the divisors are degenerate."""
    best = 1
    for bt in range(1, min(block_b, B) + 1):
        if B % bt == 0:
            best = bt
    if best * 2 >= min(block_b, B):
        return best, B
    Bt = min(block_b, B)
    return Bt, _round_up(B, Bt)


def length_regulator(x, duration, max_len=None, *, block_b=8, block_l=256,
                     exact_f32=True, out_dtype=None):
    """x: (B, T, H) float, duration: (B, T) int.

    Returns (out (B, max_len, H), mel_len (B,) int32)."""
    B, T, H = x.shape
    d = jnp.maximum(duration.astype(jnp.int32), 0)   # expand() clamps negatives
    mel_len = jnp.sum(d, axis=1)

    if max_len is None:
        # TODO(synk): max_len=None needs a host sync (dynamic output shape has
        # no Pallas equivalent); pass a static max_len when calling under jit.
        max_len = int(jax.device_get(jnp.max(mel_len)))
    max_len = int(max_len)
    out_dtype = out_dtype or x.dtype
    if max_len <= 0:
        return jnp.zeros((B, max_len, H), out_dtype), mel_len

    # Token t owns output frames [cs_lo, cs_hi).
    cs_hi = jnp.cumsum(d, axis=1)
    cs_lo = cs_hi - d

    # ---- TPU-friendly padded shapes ----------------------------------------
    T_pad = _round_up(T, 128)                      # MXU K dim / sel lane dim
    H_pad = _round_up(H, 128)                      # MXU N dim / output lane dim
    Bt, B_pad = _pick_batch_tile(B, block_b)
    TL = block_l if max_len >= block_l else _round_up(max_len, 8)
    L_pad = _round_up(max_len, TL)

    # bf16 hi/lo split of x, computed once in the wrapper (not per L-tile).
    xf = x.astype(jnp.float32)
    x_hi = xf.astype(jnp.bfloat16)
    x_lo = (xf - x_hi.astype(jnp.float32)).astype(jnp.bfloat16)

    pad_b, pad_t, pad_h = B_pad - B, T_pad - T, H_pad - H
    x_hi = jnp.pad(x_hi, ((0, pad_b), (0, pad_t), (0, pad_h)))
    x_lo = jnp.pad(x_lo, ((0, pad_b), (0, pad_t), (0, pad_h)))
    # Padded tokens / padded batch rows get an empty [lo, hi) band -> all-zero
    # sel columns/rows, so they contribute nothing.
    cs = jnp.stack([cs_lo, cs_hi], axis=1).astype(jnp.int32)   # (B, 2, T)
    cs = jnp.pad(cs, ((0, pad_b), (0, 0), (0, pad_t)))

    grid = (B_pad // Bt, L_pad // TL)
    kernel = _make_kernel(exact_f32)
    x_inputs = (x_hi, x_lo) if exact_f32 else (x_hi,)
    x_specs = [pl.BlockSpec((Bt, T_pad, H_pad), lambda i, j: (i, 0, 0))
               for _ in x_inputs]

    out = pl.pallas_call(
        kernel,
        out_shape=jax.ShapeDtypeStruct((B_pad, L_pad, H_pad), out_dtype),
        grid_spec=pltpu.PrefetchScalarGridSpec(
            num_scalar_prefetch=0,
            grid=grid,
            in_specs=[pl.BlockSpec((Bt, 2, T_pad), lambda i, j: (i, 0, 0))]
                     + x_specs,
            out_specs=pl.BlockSpec((Bt, TL, H_pad), lambda i, j: (i, j, 0)),
        ),
        compiler_params=pltpu.CompilerParams(
            dimension_semantics=("parallel", "parallel"),
            vmem_limit_bytes=64 * 1024 * 1024,
        ),
    )(cs, *x_inputs)

    return out[:B, :max_len, :H], mel_len


def reference_length_regulator(x, duration, max_len):
    """Pure numpy reference mirroring the PyTorch LengthRegulator.forward."""
    x_np = np.asarray(x)
    d_np = np.asarray(duration)
    B, T, H = x_np.shape
    outs = np.zeros((B, max_len, H), x_np.dtype)
    mel_len = np.zeros((B,), np.int64)
    for b in range(B):
        rows = []
        for t in range(T):
            r = max(int(d_np[b, t]), 0)
            if r > 0:
                rows.append(np.repeat(x_np[b, t][None, :], r, axis=0))
        e = np.concatenate(rows, axis=0) if rows else np.zeros((0, H), x_np.dtype)
        mel_len[b] = e.shape[0]
        n = min(e.shape[0], max_len)
        outs[b, :n] = e[:n]
    return outs, mel_len


if __name__ == "__main__":
    B, T, H = 2, 8, 32                     # batch, phoneme steps, encoder hidden
    key = jax.random.PRNGKey(0)
    kx, kd = jax.random.split(key)
    x = jax.random.normal(kx, (B, T, H), jnp.float32)
    duration = jax.random.randint(kd, (B, T), 0, 4)    # 0..3 mel frames per token

    out, mel_len = length_regulator(x, duration, max_len=None)
    out = jax.block_until_ready(out)
    max_len = out.shape[1]

    ref_out, ref_len = reference_length_regulator(x, duration, max_len)
    assert out.shape == (B, max_len, H)
    assert np.array_equal(np.asarray(mel_len), ref_len), "mel_len mismatch"
    assert np.allclose(np.asarray(out), ref_out, atol=1e-4, rtol=1e-4), \
        "output mismatch vs reference"

    # Also exercise the single-matmul bf16 path (typical FastSpeech2 consumer).
    out_bf16, _ = length_regulator(x, duration, max_len=max_len,
                                   exact_f32=False, out_dtype=jnp.bfloat16)
    out_bf16 = jax.block_until_ready(out_bf16)
    assert np.allclose(np.asarray(out_bf16).astype(np.float32), ref_out,
                       atol=2e-2, rtol=2e-2), "bf16 path mismatch"

    print("KERNEL_OK")
</pallas_src>

<mosaic_0001>
module attributes {stable_mosaic.version = 11 : i64} {
  func.func @kernel(%arg0: i32, %arg1: i32, %arg2: memref<2x2x128xi32, #tpu.memory_space<vmem>>, %arg3: memref<2x128x128xbf16, #tpu.memory_space<vmem>>, %arg4: memref<2x128x128xbf16, #tpu.memory_space<vmem>>, %arg5: memref<2x16x128xf32, #tpu.memory_space<vmem>>) attributes {dimension_semantics = [#tpu.dimension_semantics<parallel>, #tpu.dimension_semantics<parallel>], iteration_bounds = array<i64: 1, 1>, scalar_prefetch = 0 : i64, scratch_operands = 0 : i64, tpu.core_type = #tpu.core_type<tc>, window_params = [{transform_indices = @transform_0, window_bounds = array<i64: 2, 2, 128>}, {transform_indices = @transform_1, window_bounds = array<i64: 2, 128, 128>}, {transform_indices = @transform_2, window_bounds = array<i64: 2, 128, 128>}, {transform_indices = @transform_3, window_bounds = array<i64: 2, 16, 128>}]} {
    %c0 = arith.constant 0 : index
    %c0_0 = arith.constant 0 : index
    %c0_1 = arith.constant 0 : index
    %0 = vector.load %arg2[%c0, %c0_0, %c0_1] : memref<2x2x128xi32, #tpu.memory_space<vmem>>, vector<2x1x128xi32>
    %c0_2 = arith.constant 0 : index
    %c1 = arith.constant 1 : index
    %c0_3 = arith.constant 0 : index
    %1 = vector.load %arg2[%c0_2, %c1, %c0_3] : memref<2x2x128xi32, #tpu.memory_space<vmem>>, vector<2x1x128xi32>
    %c16_i32 = arith.constant 16 : i32
    %2 = arith.muli %arg1, %c16_i32 : i32
    %3 = tpu.iota {dimensions = array<i32: 1>} : vector<1x16x1xi32>
    %4 = vector.broadcast %2 : i32 to vector<1x16x1xi32>
    %5 = arith.addi %4, %3 : vector<1x16x1xi32>
    %6 = vector.broadcast %5 : vector<1x16x1xi32> to vector<2x16x128xi32>
    %7 = vector.broadcast %0 : vector<2x1x128xi32> to vector<2x16x128xi32>
    %8 = arith.cmpi sge, %6, %7 : vector<2x16x128xi32>
    %9 = vector.broadcast %5 : vector<1x16x1xi32> to vector<2x16x128xi32>
    %10 = vector.broadcast %1 : vector<2x1x128xi32> to vector<2x16x128xi32>
    %11 = arith.cmpi slt, %9, %10 : vector<2x16x128xi32>
    %12 = arith.andi %8, %11 : vector<2x16x128xi1>
    %13 = arith.extui %12 : vector<2x16x128xi1> to vector<2x16x128xi32>
    %14 = arith.sitofp %13 : vector<2x16x128xi32> to vector<2x16x128xf32>
    %15 = arith.truncf %14 : vector<2x16x128xf32> to vector<2x16x128xbf16>
    %c0_4 = arith.constant 0 : index
    %c0_5 = arith.constant 0 : index
    %c0_6 = arith.constant 0 : index
    %16 = vector.load %arg3[%c0_4, %c0_5, %c0_6] : memref<2x128x128xbf16, #tpu.memory_space<vmem>>, vector<2x128x128xbf16>
    %cst = arith.constant dense<0.000000e+00> : vector<2x16x128xf32>
    %17 = tpu.matmul %15, %16, %cst {dimension_numbers = #tpu.dot_dimension_numbers<[2], [1], [1], [2], [0, 0, 0, 1, 1, 2], [0], [0]>} : vector<2x16x128xbf16>, vector<2x128x128xbf16>, vector<2x16x128xf32> -> vector<2x16x128xf32>
    %c0_7 = arith.constant 0 : index
    %c0_8 = arith.constant 0 : index
    %c0_9 = arith.constant 0 : index
    %18 = vector.load %arg4[%c0_7, %c0_8, %c0_9] : memref<2x128x128xbf16, #tpu.memory_space<vmem>>, vector<2x128x128xbf16>
    %cst_10 = arith.constant dense<0.000000e+00> : vector<2x16x128xf32>
    %19 = tpu.matmul %15, %18, %cst_10 {dimension_numbers = #tpu.dot_dimension_numbers<[2], [1], [1], [2], [0, 0, 0, 1, 1, 2], [0], [0]>} : vector<2x16x128xbf16>, vector<2x128x128xbf16>, vector<2x16x128xf32> -> vector<2x16x128xf32>
    %20 = arith.addf %17, %19 : vector<2x16x128xf32>
    %c0_11 = arith.constant 0 : index
    %c0_12 = arith.constant 0 : index
    %c0_13 = arith.constant 0 : index
    %21 = vector.load %arg5[%c0_11, %c0_12, %c0_13] : memref<2x16x128xf32, #tpu.memory_space<vmem>>, vector<2x16x128xf32>
    tpu.vector_store %arg5[%c0_11, %c0_12, %c0_13], %20 {strides = array<i32>} : memref<2x16x128xf32, #tpu.memory_space<vmem>>, vector<2x16x128xf32>,
    return
  }
  func.func @transform_0(%arg0: i32, %arg1: i32) -> (i32, i32, i32) {
    %c0_i32 = arith.constant 0 : i32
    %c0_i32_0 = arith.constant 0 : i32
    %c0_i32_1 = arith.constant 0 : i32
    return %arg0, %c0_i32, %c0_i32_0 : i32, i32, i32
  }
  func.func @transform_1(%arg0: i32, %arg1: i32) -> (i32, i32, i32) {
    %c0_i32 = arith.constant 0 : i32
    %c0_i32_0 = arith.constant 0 : i32
    %c0_i32_1 = arith.constant 0 : i32
    return %arg0, %c0_i32, %c0_i32_0 : i32, i32, i32
  }
  func.func @transform_2(%arg0: i32, %arg1: i32) -> (i32, i32, i32) {
    %c0_i32 = arith.constant 0 : i32
    %c0_i32_0 = arith.constant 0 : i32
    %c0_i32_1 = arith.constant 0 : i32
    return %arg0, %c0_i32, %c0_i32_0 : i32, i32, i32
  }
  func.func @transform_3(%arg0: i32, %arg1: i32) -> (i32, i32, i32) {
    %c0_i32 = arith.constant 0 : i32
    %c0_i32_0 = arith.constant 0 : i32
    return %arg0, %arg1, %c0_i32 : i32, i32, i32
  }
}

</mosaic_0001>

<llo_original>
// kernel: tpu_custom_call.1
$region0: #{tpu_custom_call.1}
  #allocation0 [shape = 'u32[]', space=smem, size = 0x4, offset = 0x4, fixed_abs, tag = 'smem constant byte address 0x4 - core index']
  #allocation1 [shape = 'u32[144,128]{1,0:T(1,128)}', space=vmem, size = 0x12000, scoped, tag = 'internal scratch']
  %s0 = inlined_call_operand.hbm [shape: s32[2,2,128], index: 0, kind: input, shape index: {}]
  %s1 = inlined_call_operand.hbm [shape: bf16[2,128,128], index: 1, kind: input, shape index: {}]
  %s2 = inlined_call_operand.hbm [shape: bf16[2,128,128], index: 2, kind: input, shape index: {}]
  %s3 = inlined_call_operand.hbm [shape: f32[2,16,128], index: 3, kind: output, shape index: {}]
  %s4 = sld [smem:[#allocation0]]
  $region34: #{tpu_custom_call.1} parent=0
    _
  %s6 = ssub.s32 1, %s4
  %s7 = scalar_select 0, %s6, %s4
  $region1: #{tpu_custom_call.1} parent=0
    #allocation2 [shape = 'u8[2048]{0}', space=vmem, size = 0x800, scoped, tag = 'input window, operand 0, single buffered']
    #allocation3 [shape = 's32[1]{0}', space=sflag, size = 0x4, scoped, tag = 'scoped memory for tpu_custom_call.1']
    #allocation4 [shape = 's32[1]{0}', space=sflag, size = 0x4, scoped, tag = 'scoped memory for tpu_custom_call.1']
    #allocation5 [shape = 'u8[65536]{0}', space=vmem, size = 0x10000, scoped, tag = 'input window, operand 1, single buffered']
    #allocation6 [shape = 's32[1]{0}', space=sflag, size = 0x4, scoped, tag = 'scoped memory for tpu_custom_call.1']
    #allocation7 [shape = 'u8[65536]{0}', space=vmem, size = 0x10000, scoped, tag = 'input window, operand 2, single buffered']
    #allocation8 [shape = 'u8[16384]{0}', space=vmem, size = 0x4000, scoped, tag = 'output window, operand 0, single buffered']
    %8 = vsyncpa [#allocation3], 0
    %9 = vsyncpa [#allocation6], 0
    %10 = vsyncpa [#allocation4], 0
    // Predicated region
    $region2: #{tpu_custom_call.1} parent=1 // pred_check
      _
    $region3: #{tpu_custom_call.1} parent=1 // pred_check_branch
      %12 = sbr.rel (0) target = $region5
    $region4: #{tpu_custom_call.1} parent=1 // pred_region
      %s14 = ssub.s32 64, 64
      %15 = vsyncadd [#allocation3], %s14
      %s16 = sshll.u32 [#allocation2], 4
      %s17 = int_to_ptr.vmem [resolvable:$true] %s16
      %22 = dma.hbm_to_vmem [thread:$0]  %s0, 64, %s17, [#allocation3], 32, 32, 2
    $region5: #{tpu_custom_call.1} parent=1 // pred_fallthru
      _
    // Predicated region
    $region6: #{tpu_custom_call.1} parent=1 // pred_check
      _
    $region7: #{tpu_custom_call.1} parent=1 // pred_check_branch
      %24 = sbr.rel (0) target = $region9
    $region8: #{tpu_custom_call.1} parent=1 // pred_region
      %s26 = ssub.s32 2048, 2048
      %27 = vsyncadd [#allocation6], %s26
      %s28 = sshll.u32 [#allocation5], 4
      %s29 = int_to_ptr.vmem [resolvable:$true] %s28
      %34 = dma.hbm_to_vmem [thread:$0]  %s1, 2048, %s29, [#allocation6], 64, 64, 4
    $region9: #{tpu_custom_call.1} parent=1 // pred_fallthru
      _
    // Predicated region
    $region10: #{tpu_custom_call.1} parent=1 // pred_check
      _
    $region11: #{tpu_custom_call.1} parent=1 // pred_check_branch
      %36 = sbr.rel (0) target = $region13
    $region12: #{tpu_custom_call.1} parent=1 // pred_region
      %s38 = ssub.s32 2048, 2048
      %39 = vsyncadd [#allocation6], %s38
      %s40 = sshll.u32 [#allocation7], 4
      %s41 = int_to_ptr.vmem [resolvable:$true] %s40
      %46 = dma.hbm_to_vmem [thread:$0]  %s2, 2048, %s41, [#allocation6], 64, 64, 4
    $region13: #{tpu_custom_call.1} parent=1 // pred_fallthru
      _
    // Predicated region
    $region14: #{tpu_custom_call.1} parent=1 // pred_check
      _
    $region15: #{tpu_custom_call.1} parent=1 // pred_check_branch
      %48 = sbr.rel (0) target = $region17
    $region16: #{tpu_custom_call.1} parent=1 // pred_region
      %49 = dma.done [#allocation3], 64
    $region17: #{tpu_custom_call.1} parent=1 // pred_fallthru
      _
    // Predicated region
    $region18: #{tpu_custom_call.1} parent=1 // pred_check
      _
    $region19: #{tpu_custom_call.1} parent=1 // pred_check_branch
      %51 = sbr.rel (0) target = $region21
    $region20: #{tpu_custom_call.1} parent=1 // pred_region
      %52 = dma.done [#allocation6], 2048
    $region21: #{tpu_custom_call.1} parent=1 // pred_fallthru
      _
    // Predicated region
    $region22: #{tpu_custom_call.1} parent=1 // pred_check
      _
    $region23: #{tpu_custom_call.1} parent=1 // pred_check_branch
      %54 = sbr.rel (0) target = $region25
    $region24: #{tpu_custom_call.1} parent=1 // pred_region
      %55 = dma.done [#allocation6], 2048
    $region25: #{tpu_custom_call.1} parent=1 // pred_fallthru
      _
    %v57 = vld [vmem:[#allocation2] sm:$0x1]
    %v58 = vld [vmem:[#allocation2 + $0x2] sm:$0x1]
    %v59 = vld [vmem:[#allocation2 + $0x1] sm:$0x1]
    %v60 = vld [vmem:[#allocation2 + $0x3] sm:$0x1]
    %s61 = smul.u32 0, 16
    %v62 = vlaneseq
    %v63 = vshrl.u32 %v62, 7
    %v64 = vadd.s32 %v63, 8
    %v65 = vstv %s61
    %v66 = vadd.s32 %v65, %v63
    %v67 = vadd.s32 %v65, %v64
    %v68 = vlaneseq
    %v69 = vshrl.u32 %v68, 7
    %v70 = vsub.s32 0, %v69
    %v71 = vrot.slane %v57, %v70
    %v72 = vlaneseq
    %v73 = vshrl.u32 %v72, 7
    %v74 = vsub.s32 0, %v73
    %v75 = vrot.slane %v58, %v74
    %vm76 = vcmp.ge.s32.totalorder %v66, %v71
    %vm77 = vcmp.ge.s32.totalorder %v67, %v71
    %vm78 = vcmp.ge.s32.totalorder %v66, %v75
    %vm79 = vcmp.ge.s32.totalorder %v67, %v75
    %v80 = vlaneseq
    %v81 = vshrl.u32 %v80, 7
    %v82 = vsub.s32 0, %v81
    %v83 = vrot.slane %v59, %v82
    %v84 = vlaneseq
    %v85 = vshrl.u32 %v84, 7
    %v86 = vsub.s32 0, %v85
    %v87 = vrot.slane %v60, %v86
    %vm88 = vcmp.lt.s32.totalorder %v66, %v83
    %vm89 = vcmp.lt.s32.totalorder %v67, %v83
    %vm90 = vcmp.lt.s32.totalorder %v66, %v87
    %vm91 = vcmp.lt.s32.totalorder %v67, %v87
    %vm92 = vmand %vm76, %vm88
    %vm93 = vmand %vm77, %vm89
    %vm94 = vmand %vm78, %vm90
    %vm95 = vmand %vm79, %vm91
    %v96 = vsel %vm92, 1, 0
    %v97 = vsel %vm93, 1, 0
    %v98 = vsel %vm94, 1, 0
    %v99 = vsel %vm95, 1, 0
    %v100 = vcvt.s32.f32 %v96
    %v101 = vcvt.s32.f32 %v97
    %v102 = vcvt.s32.f32 %v98
    %v103 = vcvt.s32.f32 %v99
    %v104 = vpack.c.bf16 %v101, %v100
    %v105 = vpack.c.bf16 %v103, %v102
    %v106 = vld [vmem:[#allocation5] sm:$0xf]
    %v107 = vld [vmem:[#allocation5 + $0x4] sm:$0xf]
    %v108 = vld [vmem:[#allocation5 + $0x8] sm:$0xf]
    %v109 = vld [vmem:[#allocation5 + $0xc] sm:$0xf]
    %v110 = vld [vmem:[#allocation5 + $0x10] sm:$0xf]
    %v111 = vld [vmem:[#allocation5 + $0x14] sm:$0xf]
    %v112 = vld [vmem:[#allocation5 + $0x18] sm:$0xf]
    %v113 = vld [vmem:[#allocation5 + $0x1c] sm:$0xf]
    %v114 = vld [vmem:[#allocation5 + $0x20] sm:$0xf]
    %v115 = vld [vmem:[#allocation5 + $0x24] sm:$0xf]
    %v116 = vld [vmem:[#allocation5 + $0x28] sm:$0xf]
    %v117 = vld [vmem:[#allocation5 + $0x2c] sm:$0xf]
    %v118 = vld [vmem:[#allocation5 + $0x30] sm:$0xf]
    %v119 = vld [vmem:[#allocation5 + $0x34] sm:$0xf]
    %v120 = vld [vmem:[#allocation5 + $0x38] sm:$0xf]
    %v121 = vld [vmem:[#allocation5 + $0x3c] sm:$0xf]
    %v122 = vld [vmem:[#allocation5 + $0x40] sm:$0xf]
    %v123 = vld [vmem:[#allocation5 + $0x44] sm:$0xf]
    %v124 = vld [vmem:[#allocation5 + $0x48] sm:$0xf]
    %v125 = vld [vmem:[#allocation5 + $0x4c] sm:$0xf]
    %v126 = vld [vmem:[#allocation5 + $0x50] sm:$0xf]
    %v127 = vld [vmem:[#allocation5 + $0x54] sm:$0xf]
    %v128 = vld [vmem:[#allocation5 + $0x58] sm:$0xf]
    %v129 = vld [vmem:[#allocation5 + $0x5c] sm:$0xf]
    %v130 = vld [vmem:[#allocation5 + $0x60] sm:$0xf]
    %v131 = vld [vmem:[#allocation5 + $0x64] sm:$0xf]
    %v132 = vld [vmem:[#allocation5 + $0x68] sm:$0xf]
    %v133 = vld [vmem:[#allocation5 + $0x6c] sm:$0xf]
    %v134 = vld [vmem:[#allocation5 + $0x70] sm:$0xf]
    %v135 = vld [vmem:[#allocation5 + $0x74] sm:$0xf]
    %v136 = vld [vmem:[#allocation5 + $0x78] sm:$0xf]
    %v137 = vld [vmem:[#allocation5 + $0x7c] sm:$0xf]
    %v138 = vld [vmem:[#allocation7] sm:$0xf]
    %v139 = vld [vmem:[#allocation7 + $0x4] sm:$0xf]
    %v140 = vld [vmem:[#allocation7 + $0x8] sm:$0xf]
    %v141 = vld [vmem:[#allocation7 + $0xc] sm:$0xf]
    %v142 = vld [vmem:[#allocation7 + $0x10] sm:$0xf]
    %v143 = vld [vmem:[#allocation7 + $0x14] sm:$0xf]
    %v144 = vld [vmem:[#allocation7 + $0x18] sm:$0xf]
    %v145 = vld [vmem:[#allocation7 + $0x1c] sm:$0xf]
    %v146 = vld [vmem:[#allocation7 + $0x20] sm:$0xf]
    %v147 = vld [vmem:[#allocation7 + $0x24] sm:$0xf]
    %v148 = vld [vmem:[#allocation7 + $0x28] sm:$0xf]
    %v149 = vld [vmem:[#allocation7 + $0x2c] sm:$0xf]
    %v150 = vld [vmem:[#allocation7 + $0x30] sm:$0xf]
    %v151 = vld [vmem:[#allocation7 + $0x34] sm:$0xf]
    %v152 = vld [vmem:[#allocation7 + $0x38] sm:$0xf]
    %v153 = vld [vmem:[#allocation7 + $0x3c] sm:$0xf]
    %v154 = vld [vmem:[#allocation7 + $0x40] sm:$0xf]
    %v155 = vld [vmem:[#allocation7 + $0x44] sm:$0xf]
    %v156 = vld [vmem:[#allocation7 + $0x48] sm:$0xf]
    %v157 = vld [vmem:[#allocation7 + $0x4c] sm:$0xf]
    %v158 = vld [vmem:[#allocation7 + $0x50] sm:$0xf]
    %v159 = vld [vmem:[#allocation7 + $0x54] sm:$0xf]
    %v160 = vld [vmem:[#allocation7 + $0x58] sm:$0xf]
    %v161 = vld [vmem:[#allocation7 + $0x5c] sm:$0xf]
    %v162 = vld [vmem:[#allocation7 + $0x60] sm:$0xf]
    %v163 = vld [vmem:[#allocation7 + $0x64] sm:$0xf]
    %v164 = vld [vmem:[#allocation7 + $0x68] sm:$0xf]
    %v165 = vld [vmem:[#allocation7 + $0x6c] sm:$0xf]
    %v166 = vld [vmem:[#allocation7 + $0x70] sm:$0xf]
    %v167 = vld [vmem:[#allocation7 + $0x74] sm:$0xf]
    %v168 = vld [vmem:[#allocation7 + $0x78] sm:$0xf]
    %v169 = vld [vmem:[#allocation7 + $0x7c] sm:$0xf]
    %v186 = vunpack.c.l.b16 %v138
    %v187 = vunpack.c.l.b16 %v139
    %v188 = vunpack.c.l.b16 %v140
    %v189 = vunpack.c.l.b16 %v141
    %v190 = vunpack.c.l.b16 %v142
    %v191 = vunpack.c.l.b16 %v143
    %v192 = vunpack.c.l.b16 %v144
    %v193 = vunpack.c.l.b16 %v145
    %v194 = vunpack.c.l.b16 %v146
    %v195 = vunpack.c.l.b16 %v147
    %v196 = vunpack.c.l.b16 %v148
    %v197 = vunpack.c.l.b16 %v149
    %v198 = vunpack.c.l.b16 %v150
    %v199 = vunpack.c.l.b16 %v151
    %v200 = vunpack.c.l.b16 %v152
    %v201 = vunpack.c.l.b16 %v153
    %v202 = vpack.c.b16 %v187, %v186
    %v203 = vpack.c.b16 %v189, %v188
    %v204 = vpack.c.b16 %v191, %v190
    %v205 = vpack.c.b16 %v193, %v192
    %v206 = vpack.c.b16 %v195, %v194
    %v207 = vpack.c.b16 %v197, %v196
    %v208 = vpack.c.b16 %v199, %v198
    %v209 = vpack.c.b16 %v201, %v200
    %218 = vmatprep.subr.bf16.mxu0 0
    %219 = vmatpush1.bf16.msra.mxu0 %v209
    %220 = vmatprep.subr.bf16.mxu0 0
    %221 = vmatpush1.bf16.msra.mxu0 %v208
    %222 = vmatprep.subr.bf16.mxu0 0
    %223 = vmatpush1.bf16.msra.mxu0 %v207
    %224 = vmatprep.subr.bf16.mxu0 0
    %225 = vmatpush1.bf16.msra.mxu0 %v206
    %226 = vmatprep.subr.bf16.mxu0 0
    %227 = vmatpush1.bf16.msra.mxu0 %v205
    %228 = vmatprep.subr.bf16.mxu0 0
    %229 = vmatpush1.bf16.msra.mxu0 %v204
    %230 = vmatprep.subr.bf16.mxu0 0
    %231 = vmatpush1.bf16.msra.mxu0 %v203
    %232 = vmatprep.subr.bf16.mxu0 0
    %233 = vmatpush1.bf16.msra.mxu0 %v202
    %234 = vmatprep.subr.bf16.mxu0 0
    %235 = vmatpush2.bf16.msra.mxu0 0
    %236 = vmatprep.subr.bf16.mxu0 0
    %237 = vmatpush2.bf16.msra.mxu0 0
    %238 = vmatprep.subr.bf16.mxu0 0
    %239 = vmatpush2.bf16.msra.mxu0 0
    %240 = vmatprep.subr.bf16.mxu0 0
    %241 = vmatpush2.bf16.msra.mxu0 0
    %242 = vmatprep.subr.bf16.mxu0 0
    %243 = vmatpush2.bf16.msra.mxu0 0
    %244 = vmatprep.subr.bf16.mxu0 0
    %245 = vmatpush2.bf16.msra.mxu0 0
    %246 = vmatprep.subr.bf16.mxu0 0
    %247 = vmatpush2.bf16.msra.mxu0 0
    %248 = vmatprep.subr.bf16.mxu0 0
    %249 = vmatpush2.bf16.msra.mxu0 0
    %250 = vmatprep.mubr.bf16.mxu0 0
    %251 = vmatmul.mubr.bf16.gmra.mxu0 %v104
    %v252 = vpop.f32.mrf.mxu0
    %v253 = vadd.f32 0.0, %v252
    %v254 = vpop.f32.mrf.mxu0
    %v255 = vpop.f32.mrf.mxu0
    %v256 = vadd.f32 0.0, %v255
    %v257 = vpop.f32.mrf.mxu0
    %258 = vdwg.mxu0
    %v275 = vunpack.c.l.b16 %v154
    %v276 = vunpack.c.l.b16 %v155
    %v277 = vunpack.c.l.b16 %v156
    %v278 = vunpack.c.l.b16 %v157
    %v279 = vunpack.c.l.b16 %v158
    %v280 = vunpack.c.l.b16 %v159
    %v281 = vunpack.c.l.b16 %v160
    %v282 = vunpack.c.l.b16 %v161
    %v283 = vunpack.c.l.b16 %v162
    %v284 = vunpack.c.l.b16 %v163
    %v285 = vunpack.c.l.b16 %v164
    %v286 = vunpack.c.l.b16 %v165
    %v287 = vunpack.c.l.b16 %v166
    %v288 = vunpack.c.l.b16 %v167
    %v289 = vunpack.c.l.b16 %v168
    %v290 = vunpack.c.l.b16 %v169
    %v291 = vpack.c.b16 %v276, %v275
    %v292 = vpack.c.b16 %v278, %v277
    %v293 = vpack.c.b16 %v280, %v279
    %v294 = vpack.c.b16 %v282, %v281
    %v295 = vpack.c.b16 %v284, %v283
    %v296 = vpack.c.b16 %v286, %v285
    %v297 = vpack.c.b16 %v288, %v287
    %v298 = vpack.c.b16 %v290, %v289
    %307 = vmatprep.subr.bf16.mxu0 0
    %308 = vmatpush1.bf16.msra.mxu0 %v298
    %309 = vmatprep.subr.bf16.mxu0 0
    %310 = vmatpush1.bf16.msra.mxu0 %v297
    %311 = vmatprep.subr.bf16.mxu0 0
    %312 = vmatpush1.bf16.msra.mxu0 %v296
    %313 = vmatprep.subr.bf16.mxu0 0
    %314 = vmatpush1.bf16.msra.mxu0 %v295
    %315 = vmatprep.subr.bf16.mxu0 0
    %316 = vmatpush1.bf16.msra.mxu0 %v294
    %317 = vmatprep.subr.bf16.mxu0 0
    %318 = vmatpush1.bf16.msra.mxu0 %v293
    %319 = vmatprep.subr.bf16.mxu0 0
    %320 = vmatpush1.bf16.msra.mxu0 %v292
    %321 = vmatprep.subr.bf16.mxu0 0
    %322 = vmatpush1.bf16.msra.mxu0 %v291
    %323 = vmatprep.subr.bf16.mxu0 0
    %324 = vmatpush2.bf16.msra.mxu0 0
    %325 = vmatprep.subr.bf16.mxu0 0
    %326 = vmatpush2.bf16.msra.mxu0 0
    %327 = vmatprep.subr.bf16.mxu0 0
    %328 = vmatpush2.bf16.msra.mxu0 0
    %329 = vmatprep.subr.bf16.mxu0 0
    %330 = vmatpush2.bf16.msra.mxu0 0
    %331 = vmatprep.subr.bf16.mxu0 0
    %332 = vmatpush2.bf16.msra.mxu0 0
    %333 = vmatprep.subr.bf16.mxu0 0
    %334 = vmatpush2.bf16.msra.mxu0 0
    %335 = vmatprep.subr.bf16.mxu0 0
    %336 = vmatpush2.bf16.msra.mxu0 0
    %337 = vmatprep.subr.bf16.mxu0 0
    %338 = vmatpush2.bf16.msra.mxu0 0
    %339 = vmatprep.mubr.bf16.mxu0 0
    %340 = vmatmul.mubr.bf16.gmra.mxu0 %v105
    %v341 = vpop.f32.mrf.mxu0
    %v342 = vadd.f32 0.0, %v341
    %v343 = vpop.f32.mrf.mxu0
    %v344 = vpop.f32.mrf.mxu0
    %v345 = vadd.f32 0.0, %v344
    %v346 = vpop.f32.mrf.mxu0
    %347 = vdwg.mxu0
    %v364 = vunpack.c.l.b16 %v106
    %v365 = vunpack.c.l.b16 %v107
    %v366 = vunpack.c.l.b16 %v108
    %v367 = vunpack.c.l.b16 %v109
    %v368 = vunpack.c.l.b16 %v110
    %v369 = vunpack.c.l.b16 %v111
    %v370 = vunpack.c.l.b16 %v112
    %v371 = vunpack.c.l.b16 %v113
    %v372 = vunpack.c.l.b16 %v114
    %v373 = vunpack.c.l.b16 %v115
    %v374 = vunpack.c.l.b16 %v116
    %v375 = vunpack.c.l.b16 %v117
    %v376 = vunpack.c.l.b16 %v118
    %v377 = vunpack.c.l.b16 %v119
    %v378 = vunpack.c.l.b16 %v120
    %v379 = vunpack.c.l.b16 %v121
    %v380 = vpack.c.b16 %v365, %v364
    %v381 = vpack.c.b16 %v367, %v366
    %v382 = vpack.c.b16 %v369, %v368
    %v383 = vpack.c.b16 %v371, %v370
    %v384 = vpack.c.b16 %v373, %v372
    %v385 = vpack.c.b16 %v375, %v374
    %v386 = vpack.c.b16 %v377, %v376
    %v387 = vpack.c.b16 %v379, %v378
    %396 = vmatprep.subr.bf16.mxu0 0
    %397 = vmatpush1.bf16.msra.mxu0 %v387
    %398 = vmatprep.subr.bf16.mxu0 0
    %399 = vmatpush1.bf16.msra.mxu0 %v386
    %400 = vmatprep.subr.bf16.mxu0 0
    %401 = vmatpush1.bf16.msra.mxu0 %v385
    %402 = vmatprep.subr.bf16.mxu0 0
    %403 = vmatpush1.bf16.msra.mxu0 %v384
    %404 = vmatprep.subr.bf16.mxu0 0
    %405 = vmatpush1.bf16.msra.mxu0 %v383
    %406 = vmatprep.subr.bf16.mxu0 0
    %407 = vmatpush1.bf16.msra.mxu0 %v382
    %408 = vmatprep.subr.bf16.mxu0 0
    %409 = vmatpush1.bf16.msra.mxu0 %v381
    %410 = vmatprep.subr.bf16.mxu0 0
    %411 = vmatpush1.bf16.msra.mxu0 %v380
    %412 = vmatprep.subr.bf16.mxu0 0
    %413 = vmatpush2.bf16.msra.mxu0 0
    %414 = vmatprep.subr.bf16.mxu0 0
    %415 = vmatpush2.bf16.msra.mxu0 0
    %416 = vmatprep.subr.bf16.mxu0 0
    %417 = vmatpush2.bf16.msra.mxu0 0
    %418 = vmatprep.subr.bf16.mxu0 0
    %419 = vmatpush2.bf16.msra.mxu0 0
    %420 = vmatprep.subr.bf16.mxu0 0
    %421 = vmatpush2.bf16.msra.mxu0 0
    %422 = vmatprep.subr.bf16.mxu0 0
    %423 = vmatpush2.bf16.msra.mxu0 0
    %424 = vmatprep.subr.bf16.mxu0 0
    %425 = vmatpush2.bf16.msra.mxu0 0
    %426 = vmatprep.subr.bf16.mxu0 0
    %427 = vmatpush2.bf16.msra.mxu0 0
    %428 = vmatprep.mubr.bf16.mxu0 0
    %429 = vmatmul.mubr.bf16.gmra.mxu0 %v104
    %v430 = vpop.f32.mrf.mxu0
    %v431 = vadd.f32 %v253, %v430
    %v432 = vpop.f32.mrf.mxu0
    %v433 = vpop.f32.mrf.mxu0
    %v434 = vadd.f32 %v256, %v433
    %v435 = vpop.f32.mrf.mxu0
    %436 = vdwg.mxu0
    %v453 = vunpack.c.l.b16 %v122
    %v454 = vunpack.c.l.b16 %v123
    %v455 = vunpack.c.l.b16 %v124
    %v456 = vunpack.c.l.b16 %v125
    %v457 = vunpack.c.l.b16 %v126
    %v458 = vunpack.c.l.b16 %v127
    %v459 = vunpack.c.l.b16 %v128
    %v460 = vunpack.c.l.b16 %v129
    %v461 = vunpack.c.l.b16 %v130
    %v462 = vunpack.c.l.b16 %v131
    %v463 = vunpack.c.l.b16 %v132
    %v464 = vunpack.c.l.b16 %v133
    %v465 = vunpack.c.l.b16 %v134
    %v466 = vunpack.c.l.b16 %v135
    %v467 = vunpack.c.l.b16 %v136
    %v468 = vunpack.c.l.b16 %v137
    %v469 = vpack.c.b16 %v454, %v453
    %v470 = vpack.c.b16 %v456, %v455
    %v471 = vpack.c.b16 %v458, %v457
    %v472 = vpack.c.b16 %v460, %v459
    %v473 = vpack.c.b16 %v462, %v461
    %v474 = vpack.c.b16 %v464, %v463
    %v475 = vpack.c.b16 %v466, %v465
    %v476 = vpack.c.b16 %v468, %v467
    %485 = vmatprep.subr.bf16.mxu0 0
    %486 = vmatpush1.bf16.msra.mxu0 %v476
    %487 = vmatprep.subr.bf16.mxu0 0
    %488 = vmatpush1.bf16.msra.mxu0 %v475
    %489 = vmatprep.subr.bf16.mxu0 0
    %490 = vmatpush1.bf16.msra.mxu0 %v474
    %491 = vmatprep.subr.bf16.mxu0 0
    %492 = vmatpush1.bf16.msra.mxu0 %v473
    %493 = vmatprep.subr.bf16.mxu0 0
    %494 = vmatpush1.bf16.msra.mxu0 %v472
    %495 = vmatprep.subr.bf16.mxu0 0
    %496 = vmatpush1.bf16.msra.mxu0 %v471
    %497 = vmatprep.subr.bf16.mxu0 0
    %498 = vmatpush1.bf16.msra.mxu0 %v470
    %499 = vmatprep.subr.bf16.mxu0 0
    %500 = vmatpush1.bf16.msra.mxu0 %v469
    %501 = vmatprep.subr.bf16.mxu0 0
    %502 = vmatpush2.bf16.msra.mxu0 0
    %503 = vmatprep.subr.bf16.mxu0 0
    %504 = vmatpush2.bf16.msra.mxu0 0
    %505 = vmatprep.subr.bf16.mxu0 0
    %506 = vmatpush2.bf16.msra.mxu0 0
    %507 = vmatprep.subr.bf16.mxu0 0
    %508 = vmatpush2.bf16.msra.mxu0 0
    %509 = vmatprep.subr.bf16.mxu0 0
    %510 = vmatpush2.bf16.msra.mxu0 0
    %511 = vmatprep.subr.bf16.mxu0 0
    %512 = vmatpush2.bf16.msra.mxu0 0
    %513 = vmatprep.subr.bf16.mxu0 0
    %514 = vmatpush2.bf16.msra.mxu0 0
    %515 = vmatprep.subr.bf16.mxu0 0
    %516 = vmatpush2.bf16.msra.mxu0 0
    %517 = vmatprep.mubr.bf16.mxu0 0
    %518 = vmatmul.mubr.bf16.gmra.mxu0 %v105
    %v519 = vpop.f32.mrf.mxu0
    %v520 = vadd.f32 %v342, %v519
    %v521 = vpop.f32.mrf.mxu0
    %v522 = vpop.f32.mrf.mxu0
    %v523 = vadd.f32 %v345, %v522
    %v524 = vpop.f32.mrf.mxu0
    %525 = vdwg.mxu0
    %526 = vst [vmem:[#allocation8] sm:$0xff] %v431
    %527 = vst [vmem:[#allocation8 + $0x8] sm:$0xff] %v434
    %528 = vst [vmem:[#allocation8 + $0x10] sm:$0xff] %v520
    %529 = vst [vmem:[#allocation8 + $0x18] sm:$0xff] %v523
    // Predicated region
    $region26: #{tpu_custom_call.1} parent=1 // pred_check
      _
    $region27: #{tpu_custom_call.1} parent=1 // pred_check_branch
      %531 = sbr.rel (0) target = $region29
    $region28: #{tpu_custom_call.1} parent=1 // pred_region
      %s533 = ssub.s32 512, 512
      %534 = vsyncadd [#allocation4], %s533
      %s535 = sshll.u32 [#allocation8], 4
      %s536 = int_to_ptr.vmem [resolvable:$true] %s535
      %541 = dma.vmem_to_hbm [thread:$0]  %s536, 512, %s3, [#allocation4], 128, 128, 8
    $region29: #{tpu_custom_call.1} parent=1 // pred_fallthru
      _
    // Predicated region
    $region30: #{tpu_custom_call.1} parent=1 // pred_check
      _
    $region31: #{tpu_custom_call.1} parent=1 // pred_check_branch
      %543 = sbr.rel (0) target = $region33
    $region32: #{tpu_custom_call.1} parent=1 // pred_region
      %544 = dma.done [#allocation4], 512
    $region33: #{tpu_custom_call.1} parent=1 // pred_fallthru
      _
    %545 = vsyncpa [#allocation3], 1
    %546 = vsyncpa [#allocation6], 1
    %547 = vsyncpa [#allocation4], 1

</llo_original>
